<compile_context>
chip_gen: v7x
topology: tpu7x:2x2x1
jax: 0.10.0
libtpu: 0.0.40
codegen_flags: <defaults>
</compile_context>

<pallas_src>
import math
import functools

import jax
import jax.numpy as jnp
from jax import lax
from jax.experimental import pallas as pl
from jax.experimental.pallas import tpu as pltpu

TM_MAX = 1024                      # row-tile upper bound along B*Ho*Wo (sweepable)
VMEM_LIMIT = 32 * 1024 * 1024      # scoped limit handed to Mosaic (safe on all gens)
VMEM_BUDGET = 24 * 1024 * 1024     # what the tile picker is allowed to plan for


def _cdiv(a, b):
    return (a + b - 1) // b


def _round_up(x, m):
    return ((x + m - 1) // m) * m


def _step_vmem_bytes(tm, k, n_pad):
    # pallas_call double-buffers every block (including the constant-index weight
    # and bias blocks, even though they are only fetched once).
    cols = tm * k * 2          # bf16 columns tile
    out = tm * n_pad * 2       # bf16 output tile
    w = k * n_pad * 2          # bf16 weight, grid-resident
    b = n_pad * 4              # f32 bias
    return 2 * (cols + out + w + b)


def _pick_tm(m, k, n_pad, *, tm_max=TM_MAX, budget=VMEM_BUDGET):
    """Largest row tile under the VMEM budget, with an even number of grid steps
    (>= 2) so the 'parallel' M axis shards evenly across v7x's two TensorCores."""
    if m <= 16:
        return m
    n_steps = max(2, _cdiv(m, tm_max))
    if n_steps % 2:
        n_steps += 1
    tm = _round_up(_cdiv(m, n_steps), 8)
    while _step_vmem_bytes(tm, k, n_pad) > budget and tm > 8:
        n_steps += 2
        tm = _round_up(_cdiv(m, n_steps), 8)
    return max(8, min(tm, _round_up(m, 8)))


# ------------------------------ Pallas kernel --------------------------------

def _matmul_bias_kernel(cols_ref, w_ref, bias_ref, o_ref):
    """out = cols @ W + bias for one row tile.

    cols : (tm, C*kk)  bf16, already modulated by sigmoid(mask) in the glue
    w    : (C*kk, Np)  bf16, Np = out_ch padded to a multiple of 128
    bias : (1, Np)     f32
    out  : (tm, Np)    bf16 (accumulation is f32 inside the dot)
    """
    acc = jnp.dot(cols_ref[...], w_ref[...], preferred_element_type=jnp.float32)
    o_ref[...] = (acc + bias_ref[...]).astype(o_ref.dtype)


def dcn_modulated_matmul(cols, w_pad, bias_pad, *, tm):
    """(M, C*kk) pre-modulated columns -> (M, Np) bf16 outputs."""
    m, k = cols.shape
    n = w_pad.shape[1]
    grid = (_cdiv(m, tm),)   # no jnp.pad of the row axis; trailing block may be partial
    return pl.pallas_call(
        _matmul_bias_kernel,
        out_shape=jax.ShapeDtypeStruct((m, n), jnp.bfloat16),
        grid=grid,
        in_specs=[
            pl.BlockSpec((tm, k), lambda i: (i, 0)),   # bf16 modulated columns
            # Constant-index blocks: fetched once.  (Next micro-opt: mark them
            # pipeline_mode=pl.Buffered(1) to drop the second weight buffer.)
            pl.BlockSpec((k, n), lambda i: (0, 0)),    # bf16 weight
            pl.BlockSpec((1, n), lambda i: (0, 0)),    # f32 bias
        ],
        out_specs=pl.BlockSpec((tm, n), lambda i: (i, 0)),
        compiler_params=pltpu.CompilerParams(
            # Per-step VMEM = 2*(tm*K*2 + tm*Np*2 + K*Np*2 + Np*4) bytes; the
            # tile picker keeps this under VMEM_BUDGET, so 32 MiB scoped limit
            # has headroom on v5e/v6e (128 MiB phys) and v7x (64 MiB phys).
            dimension_semantics=("parallel",),
            vmem_limit_bytes=VMEM_LIMIT,
        ),
    )(cols, w_pad, bias_pad)


# ------------------------------ JAX glue --------------------------------------

def deform_cols_dxonly(x, dx, mask, ksize, stride, padding, og, Ho, Wo):
    """Pre-modulated deformable bilinear columns for DCNLayer's dy == 0 case.

    dx   : (B, Ho, Wo, og, kk) horizontal offsets (the module forces dy = 0).
    mask : (B, Ho, Wo, og, kk) sigmoid modulation.
    Returns (B*Ho*Wo, C*kk) bf16 columns with K laid out as (og, ki, kj, cpg).
    """
    B, C, H, W = x.shape
    kk = ksize * ksize
    cpg = C // og
    sh, sw = stride
    ki = jnp.repeat(jnp.arange(ksize), ksize)            # kernel-point row index
    kj = jnp.tile(jnp.arange(ksize), ksize)              # kernel-point col index

    # Vertical positions are exact integers (dy == 0): only validity matters.
    y = (jnp.arange(Ho) * sh - padding)[:, None] + ki[None, :]          # (Ho, kk)
    y_ok = (y >= 0) & (y < H)
    y_c = jnp.clip(y, 0, H - 1)

    base_x = (jnp.arange(Wo) * sw - padding).astype(jnp.float32)
    px = (base_x[None, None, :, None, None]
          + kj.astype(jnp.float32)[None, None, None, None, :]
          + dx)                                                          # (B,Ho,Wo,og,kk)
    x0f = jnp.floor(px)
    lx = px - x0f
    hx = 1.0 - lx
    x0 = x0f.astype(jnp.int32)

    # Gather source with channels on the minor axis and the group folded into the
    # row index: (B, og*H*W, cpg).  Indices are shared across the cpg channels,
    # so each gather is a contiguous cpg-wide slice (lax.gather slice_sizes=(1,cpg)).
    xs = (x.reshape(B, og, cpg, H * W).transpose(0, 1, 3, 2)
           .reshape(B, og * H * W, cpg))

    yb = y_c[None, :, None, None, :]                                     # (1,Ho,1,1,kk)
    yv = y_ok[None, :, None, None, :]
    gbase = (jnp.arange(og) * (H * W))[None, None, None, :, None]        # (1,1,1,og,1)

    def corner(xi):
        ok = yv & (xi >= 0) & (xi < W)                                   # (B,Ho,Wo,og,kk)
        xc = jnp.clip(xi, 0, W - 1)
        flat = gbase + yb * W + xc                                       # (B,Ho,Wo,og,kk)
        idx = flat.reshape(B, Ho * Wo * og * kk)
        vals = jax.vmap(lambda s, i: jnp.take(s, i, axis=0))(xs, idx)    # (B,N,cpg)
        return vals * ok.reshape(B, -1, 1).astype(vals.dtype)

    # dy == 0  =>  only the two horizontal corners contribute (2 gathers, not 4).
    v0 = corner(x0)
    v1 = corner(x0 + 1)
    # Fold sigmoid(mask) into the bilinear weights: the columns written to HBM
    # are already modulated, so the Pallas kernel is a plain matmul + bias.
    w0 = (hx * mask).reshape(B, -1, 1)
    w1 = (lx * mask).reshape(B, -1, 1)
    cols = v0 * w0 + v1 * w1                                             # (B, Ho*Wo*og*kk, cpg)
    return cols.reshape(B * Ho * Wo, og * kk * cpg).astype(jnp.bfloat16)


def init_dcn_params(key, in_ch, out_ch, offset_group, ksize):
    """Same initialisation as the PyTorch DCNLayer."""
    stdv = 1.0 / math.sqrt(in_ch * ksize * ksize)
    weight = jax.random.uniform(key, (out_ch, in_ch, ksize, ksize),
                                jnp.float32, minval=-stdv, maxval=stdv)
    bias = jnp.zeros((out_ch,), jnp.float32)
    n_om = 2 * offset_group * ksize * ksize
    om_w = jnp.zeros((n_om, in_ch, ksize, ksize), jnp.float32)   # nn.init.constant_(0)
    om_b = jnp.zeros((n_om,), jnp.float32)                       # nn.init.constant_(0)
    return dict(weight=weight, bias=bias, om_w=om_w, om_b=om_b)


def dcn_layer_forward(x, params, *, out_ch, offset_group, ksize=3,
                      stride=(1, 1), padding=1):
    B, C, H, W = x.shape
    og = offset_group
    kk = ksize * ksize
    cpg = C // og
    stride = stride if isinstance(stride, tuple) else (stride, stride)
    sh, sw = stride
    Ho = (H + 2 * padding - ksize) // sh + 1
    Wo = (W + 2 * padding - ksize) // sw + 1
    M = B * Ho * Wo
    n_off = og * kk

    # 1) conv_offset_mask: a plain dense conv, emitted straight to NHWC so the
    #    offset / mask channels are sliced without NCHW round-trip transposes.
    #    HIGHEST precision because the offsets feed coordinate math.
    # TODO(synk): textbook conv intentionally left to XLA's conv rather than an
    # im2col Pallas matmul (9x read amplification).
    om = lax.conv_general_dilated(
        x, params["om_w"], window_strides=stride,
        padding=[(padding, padding), (padding, padding)],
        dimension_numbers=("NCHW", "OIHW", "NHWC"),
        precision=lax.Precision.HIGHEST)                         # (B, Ho, Wo, 2*og*kk)
    om = om + params["om_b"]                                     # bias on last axis

    # 2) module semantics: torch.stack([zero_offset, offset], dim=2) -> vertical
    #    offset is always 0; channel r = g*kk + kp for both dx and mask.
    dx = om[..., :n_off].reshape(B, Ho, Wo, og, kk)
    mask = jax.nn.sigmoid(om[..., n_off:]).reshape(B, Ho, Wo, og, kk)

    # 3) pre-modulated deformable bilinear columns, K laid out as (og, ki, kj, cpg).
    cols = deform_cols_dxonly(x, dx, mask, ksize, stride, padding, og, Ho, Wo)

    # 4) weight/bias prepared once (tiny): K permuted to (og, ki, kj, cpg) to match
    #    the column layout, and N padded to a lane-dense multiple of 128 (unmasked
    #    vst, full MXU columns).  In a real model these live pre-stored this way.
    n_pad = _round_up(out_ch, 128)
    w_k = (params["weight"].reshape(out_ch, og, cpg, ksize, ksize)
           .transpose(1, 3, 4, 2, 0).reshape(C * kk, out_ch))
    w_pad = jnp.pad(w_k, ((0, 0), (0, n_pad - out_ch))).astype(jnp.bfloat16)
    b_pad = jnp.pad(params["bias"], (0, n_pad - out_ch)).reshape(1, n_pad)

    tm = _pick_tm(M, C * kk, n_pad)
    out = dcn_modulated_matmul(cols, w_pad, b_pad, tm=tm)        # (M, n_pad) bf16

    # Module contract is NCHW float32; a consumer that accepts NHWC bf16 could
    # take out[:, :out_ch].reshape(B, Ho, Wo, out_ch) directly and skip this pass.
    out = out[:, :out_ch].reshape(B, Ho, Wo, out_ch).transpose(0, 3, 1, 2)
    return out.astype(jnp.float32)


# -------------------- plain-JAX reference (checking only) --------------------

def dcn_reference(x, params, *, out_ch, og, ksize, stride, padding):
    """Straightforward f32 re-implementation of DCNLayer.forward (torchvision
    deform_conv2d bilinear semantics; dy forced to 0 by the module)."""
    B, C, H, W = x.shape
    kk = ksize * ksize
    cpg = C // og
    sh, sw = stride
    Ho = (H + 2 * padding - ksize) // sh + 1
    Wo = (W + 2 * padding - ksize) // sw + 1
    om = lax.conv_general_dilated(
        x, params["om_w"], window_strides=stride,
        padding=[(padding, padding), (padding, padding)],
        dimension_numbers=("NCHW", "OIHW", "NCHW"),
        precision=lax.Precision.HIGHEST)
    om = om + params["om_b"][None, :, None, None]
    n_off = og * kk
    dx = om[:, :n_off].reshape(B, og, kk, Ho, Wo)
    mask = jax.nn.sigmoid(om[:, n_off:]).reshape(B, og, kk, Ho, Wo)

    ki = jnp.repeat(jnp.arange(ksize), ksize).astype(jnp.float32)
    kj = jnp.tile(jnp.arange(ksize), ksize).astype(jnp.float32)
    base_y = (jnp.arange(Ho) * sh - padding).astype(jnp.float32)
    base_x = (jnp.arange(Wo) * sw - padding).astype(jnp.float32)
    py = base_y[None, None, None, :, None] + ki[None, None, :, None, None]   # dy == 0
    px = base_x[None, None, None, None, :] + kj[None, None, :, None, None] + dx
    py = jnp.broadcast_to(py, px.shape)

    y0 = jnp.floor(py); x0 = jnp.floor(px)
    ly = py - y0; lx = px - x0
    hy = 1.0 - ly; hx = 1.0 - lx
    y0i = y0.astype(jnp.int32); x0i = x0.astype(jnp.int32)
    xg = x.reshape(B, og, cpg, H * W)

    def corner(yi, xi):
        ok = ((yi >= 0) & (yi < H) & (xi >= 0) & (xi < W)).astype(x.dtype)
        yc = jnp.clip(yi, 0, H - 1)
        xc = jnp.clip(xi, 0, W - 1)
        flat = (yc * W + xc).reshape(B, og, 1, kk * Ho * Wo)
        flat = jnp.broadcast_to(flat, (B, og, cpg, kk * Ho * Wo))
        v = jnp.take_along_axis(xg, flat, axis=3).reshape(B, og, cpg, kk, Ho, Wo)
        return v * ok[:, :, None]

    samp = (corner(y0i, x0i) * (hy * hx)[:, :, None]
            + corner(y0i, x0i + 1) * (hy * lx)[:, :, None]
            + corner(y0i + 1, x0i) * (ly * hx)[:, :, None]
            + corner(y0i + 1, x0i + 1) * (ly * lx)[:, :, None])
    samp = samp * mask[:, :, None]                                # (B,og,cpg,kk,Ho,Wo)
    w4 = params["weight"].reshape(out_ch, og, cpg, kk)
    out = jnp.einsum("bgckhw,ogck->bohw", samp, w4,
                     precision=lax.Precision.HIGHEST)
    return out + params["bias"][None, :, None, None]


# ------------------------------ demo / check ----------------------------------

if __name__ == "__main__":
    key = jax.random.PRNGKey(0)
    kx, kw, ko1, ko2 = jax.random.split(key, 4)

    B, in_ch, H, W = 2, 4, 16, 16
    out_ch, offset_group, ksize, stride, padding = 8, 2, 3, (1, 1), 1

    x = jax.random.normal(kx, (B, in_ch, H, W), jnp.float32)
    params = init_dcn_params(kw, in_ch, out_ch, offset_group, ksize)

    fwd = jax.jit(functools.partial(
        dcn_layer_forward, out_ch=out_ch, offset_group=offset_group,
        ksize=ksize, stride=stride, padding=padding))

    # Check 1: the module's deterministic init gives zero offsets and mask=0.5,
    # so deform_conv2d(x, ...) == 0.5 * conv2d(x, W) + b.
    out = fwd(x, params)
    jax.block_until_ready(out)
    ref = 0.5 * lax.conv_general_dilated(
        x, params["weight"], window_strides=stride,
        padding=[(padding, padding), (padding, padding)],
        dimension_numbers=("NCHW", "OIHW", "NCHW"),
        precision=lax.Precision.HIGHEST)
    ref = ref + params["bias"].reshape(1, -1, 1, 1)
    assert out.shape == (B, out_ch, H, W)
    err1 = float(jnp.max(jnp.abs(out - ref)))
    assert jnp.allclose(out, ref, atol=2e-2, rtol=2e-2), err1

    # Check 2: non-trivial offsets / masks vs a plain-JAX f32 reference of the
    # exact module semantics (exercises the dx / mask channel mapping and the
    # (og, ki, kj, cpg) weight permutation, which check 1 cannot see).
    n_om = 2 * offset_group * ksize * ksize
    params2 = dict(params)
    params2["om_w"] = 0.1 * jax.random.normal(
        ko1, (n_om, in_ch, ksize, ksize), jnp.float32)
    params2["om_b"] = 0.5 * jax.random.normal(ko2, (n_om,), jnp.float32)
    out2 = fwd(x, params2)
    jax.block_until_ready(out2)
    ref2 = dcn_reference(x, params2, out_ch=out_ch, og=offset_group,
                         ksize=ksize, stride=stride, padding=padding)
    err2 = float(jnp.max(jnp.abs(out2 - ref2)))
    assert jnp.allclose(out2, ref2, atol=5e-2, rtol=5e-2), err2

    print("KERNEL_OK")
</pallas_src>

<mosaic_0001>
module attributes {stable_mosaic.version = 11 : i64} {
  func.func @_matmul_bias_kernel(%arg0: i32, %arg1: memref<256x36xbf16, #tpu.memory_space<vmem>>, %arg2: memref<36x128xbf16, #tpu.memory_space<vmem>>, %arg3: memref<1x128xf32, #tpu.memory_space<vmem>>, %arg4: memref<256x128xbf16, #tpu.memory_space<vmem>>) attributes {dimension_semantics = [#tpu.dimension_semantics<parallel>], iteration_bounds = array<i64: 2>, scalar_prefetch = 0 : i64, scratch_operands = 0 : i64, tpu.core_type = #tpu.core_type<tc>, window_params = [{transform_indices = @transform_0, window_bounds = array<i64: 256, 36>}, {pipeline_mode = #tpu.pipeline_mode<synchronous>, transform_indices = @transform_1, window_bounds = array<i64: 36, 128>}, {pipeline_mode = #tpu.pipeline_mode<synchronous>, transform_indices = @transform_2, window_bounds = array<i64: 1, 128>}, {transform_indices = @transform_3, window_bounds = array<i64: 256, 128>}]} {
    %c0 = arith.constant 0 : index
    %c0_0 = arith.constant 0 : index
    %0 = vector.load %arg1[%c0, %c0_0] : memref<256x36xbf16, #tpu.memory_space<vmem>>, vector<256x36xbf16>
    %c0_1 = arith.constant 0 : index
    %c0_2 = arith.constant 0 : index
    %1 = vector.load %arg2[%c0_1, %c0_2] : memref<36x128xbf16, #tpu.memory_space<vmem>>, vector<36x128xbf16>
    %cst = arith.constant dense<0.000000e+00> : vector<256x128xf32>
    %2 = tpu.matmul %0, %1, %cst {dimension_numbers = #tpu.dot_dimension_numbers<[1], [0], [0], [1], [0, 0, 1, 1], [], []>} : vector<256x36xbf16>, vector<36x128xbf16>, vector<256x128xf32> -> vector<256x128xf32>
    %c0_3 = arith.constant 0 : index
    %c0_4 = arith.constant 0 : index
    %3 = vector.load %arg3[%c0_3, %c0_4] : memref<1x128xf32, #tpu.memory_space<vmem>>, vector<1x128xf32>
    %4 = vector.broadcast %3 : vector<1x128xf32> to vector<256x128xf32>
    %5 = arith.addf %2, %4 : vector<256x128xf32>
    %6 = arith.truncf %5 : vector<256x128xf32> to vector<256x128xbf16>
    %c0_5 = arith.constant 0 : index
    %c0_6 = arith.constant 0 : index
    %7 = vector.load %arg4[%c0_5, %c0_6] : memref<256x128xbf16, #tpu.memory_space<vmem>>, vector<256x128xbf16>
    tpu.vector_store %arg4[%c0_5, %c0_6], %6 {strides = array<i32>} : memref<256x128xbf16, #tpu.memory_space<vmem>>, vector<256x128xbf16>,
    return
  }
  func.func @transform_0(%arg0: i32) -> (i32, i32) {
    %c0_i32 = arith.constant 0 : i32
    %c0_i32_0 = arith.constant 0 : i32
    return %arg0, %c0_i32 : i32, i32
  }
  func.func @transform_1(%arg0: i32) -> (i32, i32) {
    %c0_i32 = arith.constant 0 : i32
    %c0_i32_0 = arith.constant 0 : i32
    %c0_i32_1 = arith.constant 0 : i32
    return %c0_i32, %c0_i32_0 : i32, i32
  }
  func.func @transform_2(%arg0: i32) -> (i32, i32) {
    %c0_i32 = arith.constant 0 : i32
    %c0_i32_0 = arith.constant 0 : i32
    %c0_i32_1 = arith.constant 0 : i32
    return %c0_i32, %c0_i32_0 : i32, i32
  }
  func.func @transform_3(%arg0: i32) -> (i32, i32) {
    %c0_i32 = arith.constant 0 : i32
    %c0_i32_0 = arith.constant 0 : i32
    return %arg0, %c0_i32 : i32, i32
  }
}

</mosaic_0001>

<llo_original>
// kernel: dcn_layer_forward.1
$region0: #{dcn_layer_forward.1}
  #allocation0 [shape = 'u32[]', space=smem, size = 0x4, offset = 0x4, fixed_abs, tag = 'smem constant byte address 0x4 - core index']
  #allocation1 [shape = 'u32[144,128]{1,0:T(1,128)}', space=vmem, size = 0x12000, scoped, tag = 'internal scratch']
  %s0 = inlined_call_operand.vmem [shape: bf16[512,36], index: 0, kind: input, shape index: {}]
  %s1 = inlined_call_operand.vmem [shape: bf16[36,128], index: 1, kind: input, shape index: {}]
  %s2 = inlined_call_operand.vmem [shape: f32[1,128], index: 2, kind: input, shape index: {}]
  %s3 = inlined_call_operand.vmem [shape: bf16[512,128], index: 3, kind: output, shape index: {}]
  %s4 = sld [smem:[#allocation0]]
  $region45: #{dcn_layer_forward.1} parent=0
    _
  %s6 = ssub.s32 1, %s4
  %s7 = scalar_select 0, %s6, %s4
  loop: start=0, step=1, limit=4
  $region2: #{dcn_layer_forward.1} parent=0 // loop_pre_header
    _
  $region3: #{dcn_layer_forward.1} parent=0 // loop_header
    %s9 = sphi 0, %s13
    %p10 = scmp.ge.s32.totalorder %s9, 4
    %s19 = sphi 0, %s21
    %s22 = sphi 0, %s19
    %s23 = sphi 0, %s22
    %s39 = sphi 0, %s23
    %s43 = sphi 0, %s43
    %s45 = sphi 0, %s43
    %s46 = sphi 0, %s45
    %s60 = sphi 0, %s46
    %s64 = sphi 0, %s64
    %s66 = sphi 0, %s64
    %s67 = sphi 0, %s66
    %s81 = sphi 0, %s67
    %s87 = sphi 0, %s89
    %s90 = sphi 0, %s87
    %s91 = sphi 0, %s90
    %s107 = sphi 0, %s91
  $region4: #{dcn_layer_forward.1} parent=0 // loop_header_branch
    %12 = sbr.rel (%p10) target = $region8
  $region5: #{dcn_layer_forward.1} parent=0 // loop_body
    %s14 = ssub.s32 %s9, 1
    %s15 = ssub.s32 %s9, 2
    %s16 = sadd.s32 %s9, 1
    %s17 = ssub.s32 %s9, %s16
    %p18 = scmp.eq.s32.totalorder %s17, 0
    %s20 = sadd.s32 %s19, 1
    %s21 = scalar_select %p18, %s19, %s20
    %p24 = pneg %p18
    %p25 = scmp.eq.s32.totalorder %s9, 1
    %p26 = por %p24, %p25
    %p27 = scmp.ne.s32.totalorder %s19, %s22
    %p28 = scmp.eq.s32.totalorder %s9, 0
    %p29 = por %p27, %p28
    %p30 = scmp.ne.s32.totalorder %s19, %s22
    %p31 = scmp.eq.s32.totalorder %s14, 1
    %p32 = por %p30, %p31
    %p33 = scmp.ne.s32.totalorder %s22, %s23
    %p34 = scmp.eq.s32.totalorder %s14, 0
    %p35 = por %p33, %p34
    %p36 = scmp.ne.s32.totalorder %s22, %s23
    %p37 = scmp.eq.s32.totalorder %s15, 1
    %p38 = por %p36, %p37
    %p40 = scmp.ne.s32.totalorder %s23, %s39
    %p41 = scmp.eq.s32.totalorder %s15, 0
    %p42 = por %p40, %p41
    %s44 = sadd.s32 %s43, 1
    %p47 = scmp.eq.s32.totalorder %s9, 1
    %p48 = scmp.ne.s32.totalorder %s43, %s45
    %p49 = scmp.eq.s32.totalorder %s9, 0
    %p50 = por %p48, %p49
    %p51 = scmp.ne.s32.totalorder %s43, %s45
    %p52 = scmp.eq.s32.totalorder %s14, 1
    %p53 = por %p51, %p52
    %p54 = scmp.ne.s32.totalorder %s45, %s46
    %p55 = scmp.eq.s32.totalorder %s14, 0
    %p56 = por %p54, %p55
    %p57 = scmp.ne.s32.totalorder %s45, %s46
    %p58 = scmp.eq.s32.totalorder %s15, 1
    %p59 = por %p57, %p58
    %p61 = scmp.ne.s32.totalorder %s46, %s60
    %p62 = scmp.eq.s32.totalorder %s15, 0
    %p63 = por %p61, %p62
    %s65 = sadd.s32 %s64, 1
    %p68 = scmp.eq.s32.totalorder %s9, 1
    %p69 = scmp.ne.s32.totalorder %s64, %s66
    %p70 = scmp.eq.s32.totalorder %s9, 0
    %p71 = por %p69, %p70
    %p72 = scmp.ne.s32.totalorder %s64, %s66
    %p73 = scmp.eq.s32.totalorder %s14, 1
    %p74 = por %p72, %p73
    %p75 = scmp.ne.s32.totalorder %s66, %s67
    %p76 = scmp.eq.s32.totalorder %s14, 0
    %p77 = por %p75, %p76
    %p78 = scmp.ne.s32.totalorder %s66, %s67
    %p79 = scmp.eq.s32.totalorder %s15, 1
    %p80 = por %p78, %p79
    %p82 = scmp.ne.s32.totalorder %s67, %s81
    %p83 = scmp.eq.s32.totalorder %s15, 0
    %p84 = por %p82, %p83
    %s85 = ssub.s32 %s9, %s16
    %p86 = scmp.eq.s32.totalorder %s85, 0
    %s88 = sadd.s32 %s87, 1
    %s89 = scalar_select %p86, %s87, %s88
    %p92 = pneg %p86
    %p93 = scmp.eq.s32.totalorder %s9, 1
    %p94 = por %p92, %p93
    %p95 = scmp.ne.s32.totalorder %s87, %s90
    %p96 = scmp.eq.s32.totalorder %s9, 0
    %p97 = por %p95, %p96
    %p98 = scmp.ne.s32.totalorder %s87, %s90
    %p99 = scmp.eq.s32.totalorder %s14, 1
    %p100 = por %p98, %p99
    %p101 = scmp.ne.s32.totalorder %s90, %s91
    %p102 = scmp.eq.s32.totalorder %s14, 0
    %p103 = por %p101, %p102
    %p104 = scmp.ne.s32.totalorder %s90, %s91
    %p105 = scmp.eq.s32.totalorder %s15, 1
    %p106 = por %p104, %p105
    %p108 = scmp.ne.s32.totalorder %s91, %s107
    %p109 = scmp.eq.s32.totalorder %s15, 0
    %p110 = por %p108, %p109
    %p111 = scmp.le.s32.totalorder 1, %s9
    %p112 = scmp.lt.s32.totalorder %s9, 3
    %p113 = pnand %p111, %p112
    %p114 = pneg %p113
    // Predicated region
    $region9: #{dcn_layer_forward.1} parent=5 // pred_check
      _
    $region10: #{dcn_layer_forward.1} parent=5 // pred_check_branch
      %116 = sbr.rel (%p113) target = $region12
    $region11: #{dcn_layer_forward.1} parent=5 // pred_region
      %s117 = ssub.s32 %s9, 1
      // Predicated region
      $region13: #{dcn_layer_forward.1} parent=11 // pred_check
        %p118 = pneg %p56
      $region14: #{dcn_layer_forward.1} parent=11 // pred_check_branch
        %120 = sbr.rel (%p118) target = $region16
      $region15: #{dcn_layer_forward.1} parent=11 // pred_region
        _
      $region16: #{dcn_layer_forward.1} parent=11 // pred_fallthru
        _
      // Predicated region
      $region17: #{dcn_layer_forward.1} parent=11 // pred_check
        %p121 = pneg %p77
      $region18: #{dcn_layer_forward.1} parent=11 // pred_check_branch
        %123 = sbr.rel (%p121) target = $region20
      $region19: #{dcn_layer_forward.1} parent=11 // pred_region
        _
      $region20: #{dcn_layer_forward.1} parent=11 // pred_fallthru
        _
    $region12: #{dcn_layer_forward.1} parent=5 // pred_fallthru
      _
    %p124 = scmp.lt.s32.totalorder %s9, 2
    // Predicated region
    $region21: #{dcn_layer_forward.1} parent=5 // pred_check
      %p125 = pneg %p124
    $region22: #{dcn_layer_forward.1} parent=5 // pred_check_branch
      %127 = sbr.rel (%p125) target = $region24
    $region23: #{dcn_layer_forward.1} parent=5 // pred_region
      // Predicated region
      $region25: #{dcn_layer_forward.1} parent=23 // pred_check
        %p128 = pneg %p29
      $region26: #{dcn_layer_forward.1} parent=23 // pred_check_branch
        %130 = sbr.rel (%p128) target = $region28
      $region27: #{dcn_layer_forward.1} parent=23 // pred_region
        %s131 = smul.u32 32, %s9
        %p132 = scmp.lt.s32.totalorder %s131, 63
        %s133 = scalar_select %p132, %s131, 63
        %s134 = smul.addr %s133, 4
        %s135 = scalar_lea.vmem %s0, %s134
        %s136 = smul.u32 32, %s9
      $region28: #{dcn_layer_forward.1} parent=23 // pred_fallthru
        _
    $region24: #{dcn_layer_forward.1} parent=5 // pred_fallthru
      _
    %p137 = scmp.le.s32.totalorder 1, %s9
    %p138 = scmp.lt.s32.totalorder %s9, 3
    %p139 = pnand %p137, %p138
    %p140 = pneg %p139
    // Predicated region
    $region29: #{dcn_layer_forward.1} parent=5 // pred_check
      _
    $region30: #{dcn_layer_forward.1} parent=5 // pred_check_branch
      %142 = sbr.rel (%p139) target = $region32
    $region31: #{dcn_layer_forward.1} parent=5 // pred_region
      %s143 = ssub.s32 %s9, 1
      %s144 = smul.u32 32, %s14
      %p145 = scmp.lt.s32.totalorder %s144, 63
      %s146 = scalar_select %p145, %s144, 63
      %s147 = smul.addr %s146, 4
      %s148 = scalar_lea.vmem %s0, %s147
      %p149 = pneg %p35
      %p150 = pneg %p32
      %p151 = pneg %p56
      %p152 = pneg %p53
      %p153 = pneg %p77
      %p154 = pneg %p74
      %p155 = pneg %p103
      %p156 = pneg %p100
      %s157 = smul.u32 32, %s14
      %p158 = scmp.lt.s32.totalorder %s157, 63
      %s159 = scalar_select %p158, %s157, 63
      %s160 = smul.addr %s159, 4
      %s161 = scalar_lea.vmem %s3, %s160
      %s162 = smul.u32 32, %s14
      %p163 = scmp.lt.s32.totalorder %s162, 63
      %s164 = scalar_select %p163, %s162, 63
      %s165 = smul.addr %s164, 4
      %s166 = scalar_lea.vmem %s0, %s165
      %s167 = smul.u32 32, %s14
      %s168 = smul.u32 32, %s14
      %p169 = scmp.lt.s32.totalorder %s168, 63
      %s170 = scalar_select %p169, %s168, 63
      %s171 = smul.addr %s170, 4
      %s172 = scalar_lea.vmem %s3, %s171
      %s173 = smul.u32 32, %s14
      %v175 = vld [vmem:[%s166] sm:$0xf]
      %v176 = vld [vmem:[%s166 + $0x4] sm:$0xf]
      %v177 = vld [vmem:[%s166 + $0x8] sm:$0xf]
      %v178 = vld [vmem:[%s166 + $0xc] sm:$0xf]
      %v179 = vld [vmem:[%s166 + $0x10] sm:$0xf]
      %v180 = vld [vmem:[%s166 + $0x14] sm:$0xf]
      %v181 = vld [vmem:[%s166 + $0x18] sm:$0xf]
      %v182 = vld [vmem:[%s166 + $0x1c] sm:$0xf]
      %v183 = vld [vmem:[%s166 + $0x20] sm:$0xf]
      %v184 = vld [vmem:[%s166 + $0x24] sm:$0xf]
      %v185 = vld [vmem:[%s166 + $0x28] sm:$0xf]
      %v186 = vld [vmem:[%s166 + $0x2c] sm:$0xf]
      %v187 = vld [vmem:[%s166 + $0x30] sm:$0xf]
      %v188 = vld [vmem:[%s166 + $0x34] sm:$0xf]
      %v189 = vld [vmem:[%s166 + $0x38] sm:$0xf]
      %v190 = vld [vmem:[%s166 + $0x3c] sm:$0xf]
      %v191 = vld [vmem:[%s166 + $0x40] sm:$0xf]
      %v192 = vld [vmem:[%s166 + $0x44] sm:$0xf]
      %v193 = vld [vmem:[%s166 + $0x48] sm:$0xf]
      %v194 = vld [vmem:[%s166 + $0x4c] sm:$0xf]
      %v195 = vld [vmem:[%s166 + $0x50] sm:$0xf]
      %v196 = vld [vmem:[%s166 + $0x54] sm:$0xf]
      %v197 = vld [vmem:[%s166 + $0x58] sm:$0xf]
      %v198 = vld [vmem:[%s166 + $0x5c] sm:$0xf]
      %v199 = vld [vmem:[%s166 + $0x60] sm:$0xf]
      %v200 = vld [vmem:[%s166 + $0x64] sm:$0xf]
      %v201 = vld [vmem:[%s166 + $0x68] sm:$0xf]
      %v202 = vld [vmem:[%s166 + $0x6c] sm:$0xf]
      %v203 = vld [vmem:[%s166 + $0x70] sm:$0xf]
      %v204 = vld [vmem:[%s166 + $0x74] sm:$0xf]
      %v205 = vld [vmem:[%s166 + $0x78] sm:$0xf]
      %v206 = vld [vmem:[%s166 + $0x7c] sm:$0xf]
      %v207 = vld [vmem:[%s1] sm:$0xf]
      %v208 = vld [vmem:[%s1 + $0x4] sm:$0xf]
      %v209 = vld [vmem:[%s1 + $0x8] sm:$0xf]
      %v210 = vld [vmem:[%s1 + $0xc] sm:$0xf]
      %v211 = vld [vmem:[%s1 + $0x10] sm:$0x3]
      %v212 = vld [vmem:[%s2] sm:$0x1]
      %v214 = vlaneseq
      %v215 = vshrl.u32 %v214, 7
      %v216 = vsub.s32 0, %v215
      %v217 = vrot.slane %v212, %v216
      %v251 = vunpack.c.l.b16 %v175
      %v252 = vunpack.c.l.b16 %v176
      %v253 = vunpack.c.l.b16 %v177
      %v254 = vunpack.c.l.b16 %v178
      %v255 = vunpack.c.l.b16 %v179
      %v256 = vunpack.c.l.b16 %v180
      %v257 = vunpack.c.l.b16 %v181
      %v258 = vunpack.c.l.b16 %v182
      %v259 = vunpack.c.l.b16 %v183
      %v260 = vunpack.c.l.b16 %v184
      %v261 = vunpack.c.l.b16 %v185
      %v262 = vunpack.c.l.b16 %v186
      %v263 = vunpack.c.l.b16 %v187
      %v264 = vunpack.c.l.b16 %v188
      %v265 = vunpack.c.l.b16 %v189
      %v266 = vunpack.c.l.b16 %v190
      %v267 = vunpack.c.l.b16 %v191
      %v268 = vunpack.c.l.b16 %v192
      %v269 = vunpack.c.l.b16 %v193
      %v270 = vunpack.c.l.b16 %v194
      %v271 = vunpack.c.l.b16 %v195
      %v272 = vunpack.c.l.b16 %v196
      %v273 = vunpack.c.l.b16 %v197
      %v274 = vunpack.c.l.b16 %v198
      %v275 = vunpack.c.l.b16 %v199
      %v276 = vunpack.c.l.b16 %v200
      %v277 = vunpack.c.l.b16 %v201
      %v278 = vunpack.c.l.b16 %v202
      %v279 = vunpack.c.l.b16 %v203
      %v280 = vunpack.c.l.b16 %v204
      %v281 = vunpack.c.l.b16 %v205
      %v282 = vunpack.c.l.b16 %v206
      %v283 = vpack.c.b16 %v252, %v251
      %v284 = vpack.c.b16 %v254, %v253
      %v285 = vpack.c.b16 %v256, %v255
      %v286 = vpack.c.b16 %v258, %v257
      %v287 = vpack.c.b16 %v260, %v259
      %v288 = vpack.c.b16 %v262, %v261
      %v289 = vpack.c.b16 %v264, %v263
      %v290 = vpack.c.b16 %v266, %v265
      %v291 = vpack.c.b16 %v268, %v267
      %v292 = vpack.c.b16 %v270, %v269
      %v293 = vpack.c.b16 %v272, %v271
      %v294 = vpack.c.b16 %v274, %v273
      %v295 = vpack.c.b16 %v276, %v275
      %v296 = vpack.c.b16 %v278, %v277
      %v297 = vpack.c.b16 %v280, %v279
      %v298 = vpack.c.b16 %v282, %v281
      %v304 = vunpack.c.l.b16 %v207
      %v305 = vunpack.c.l.b16 %v208
      %v306 = vunpack.c.l.b16 %v209
      %v307 = vunpack.c.l.b16 %v210
      %v308 = vunpack.c.l.b16 %v211
      %v309 = vpack.c.b16 %v305, %v304
      %v310 = vpack.c.b16 %v307, %v306
      %v311 = vpack.c.b16 %v308, %v308
      %vm314 = vcmask 293888
      %v316 = vsel %vm314, %v283, 0
      %v319 = vsel %vm314, %v284, 0
      %v322 = vsel %vm314, %v285, 0
      %v325 = vsel %vm314, %v286, 0
      %v328 = vsel %vm314, %v287, 0
      %v331 = vsel %vm314, %v288, 0
      %v334 = vsel %vm314, %v289, 0
      %v337 = vsel %vm314, %v290, 0
      %v340 = vsel %vm314, %v291, 0
      %v343 = vsel %vm314, %v292, 0
      %v346 = vsel %vm314, %v293, 0
      %v349 = vsel %vm314, %v294, 0
      %v352 = vsel %vm314, %v295, 0
      %v355 = vsel %vm314, %v296, 0
      %v358 = vsel %vm314, %v297, 0
      %v361 = vsel %vm314, %v298, 0
      %vm363 = vcmask 1041408
      %v365 = vsel %vm363, %v311, 0
      %367 = vmatprep.subr.bf16.mxu0 0
      %368 = vmatpush1.bf16.msra.mxu0 %v309
      %369 = vmatprep.subr.bf16.mxu0 0
      %370 = vmatpush1.bf16.msra.mxu0 %v310
      %371 = vmatprep.subr.bf16.mxu0 0
      %372 = vmatpush1.bf16.msra.mxu0 %v365
      %373 = vmatprep.subr.bf16.mxu0 0
      %374 = vmatpush1.bf16.msra.mxu0 0
      %375 = vmatprep.subr.bf16.mxu0 0
      %376 = vmatpush1.bf16.msra.mxu0 0
      %377 = vmatprep.subr.bf16.mxu0 0
      %378 = vmatpush1.bf16.msra.mxu0 0
      %379 = vmatprep.subr.bf16.mxu0 0
      %380 = vmatpush1.bf16.msra.mxu0 0
      %381 = vmatprep.subr.bf16.mxu0 0
      %382 = vmatpush1.bf16.msra.mxu0 0
      %383 = vmatprep.subr.bf16.mxu0 0
      %384 = vmatpush1.bf16.msra.mxu0 0
      %385 = vmatprep.subr.bf16.mxu0 0
      %386 = vmatpush1.bf16.msra.mxu0 0
      %387 = vmatprep.subr.bf16.mxu0 0
      %388 = vmatpush1.bf16.msra.mxu0 0
      %389 = vmatprep.subr.bf16.mxu0 0
      %390 = vmatpush1.bf16.msra.mxu0 0
      %391 = vmatprep.subr.bf16.mxu0 0
      %392 = vmatpush1.bf16.msra.mxu0 0
      %393 = vmatprep.subr.bf16.mxu0 0
      %394 = vmatpush1.bf16.msra.mxu0 0
      %395 = vmatprep.subr.bf16.mxu0 0
      %396 = vmatpush1.bf16.msra.mxu0 0
      %397 = vmatprep.subr.bf16.mxu0 0
      %398 = vmatpush1.bf16.msra.mxu0 0
      %399 = vmatprep.mubr.bf16.mxu0 0
      %400 = vmatmul.mubr.bf16.gmra.mrb[0].mxu0 %v316
      %v401 = vpop.f32.mrb[0].mxu0
      %v402 = vadd.f32 %v217, %v401
      %v403 = vpop.f32.mrb[0].mxu0
      %v404 = vpop.f32.mrb[0].mxu0
      %v405 = vadd.f32 %v217, %v404
      %v406 = vpop.f32.mrb[0].mxu0
      %407 = vmatprep.mubr.bf16.mxu0 0
      %408 = vmatmul.mubr.bf16.gmra.mrb[0].mxu0 %v319
      %v409 = vpop.f32.mrb[0].mxu0
      %v410 = vadd.f32 %v217, %v409
      %v411 = vpop.f32.mrb[0].mxu0
      %v412 = vpop.f32.mrb[0].mxu0
      %v413 = vadd.f32 %v217, %v412
      %v414 = vpop.f32.mrb[0].mxu0
      %415 = vmatprep.mubr.bf16.mxu0 0
      %416 = vmatmul.mubr.bf16.gmra.mrb[0].mxu0 %v322
      %v417 = vpop.f32.mrb[0].mxu0
      %v418 = vadd.f32 %v217, %v417
      %v419 = vpop.f32.mrb[0].mxu0
      %v420 = vpop.f32.mrb[0].mxu0
      %v421 = vadd.f32 %v217, %v420
      %v422 = vpop.f32.mrb[0].mxu0
      %423 = vmatprep.mubr.bf16.mxu0 0
      %424 = vmatmul.mubr.bf16.gmra.mrb[0].mxu0 %v325
      %v425 = vpop.f32.mrb[0].mxu0
      %v426 = vadd.f32 %v217, %v425
      %v427 = vpop.f32.mrb[0].mxu0
      %v428 = vpop.f32.mrb[0].mxu0
      %v429 = vadd.f32 %v217, %v428
      %v430 = vpop.f32.mrb[0].mxu0
      %431 = vmatprep.mubr.bf16.mxu0 0
      %432 = vmatmul.mubr.bf16.gmra.mrb[0].mxu0 %v328
      %v433 = vpop.f32.mrb[0].mxu0
      %v434 = vadd.f32 %v217, %v433
      %v435 = vpop.f32.mrb[0].mxu0
      %v436 = vpop.f32.mrb[0].mxu0
      %v437 = vadd.f32 %v217, %v436
      %v438 = vpop.f32.mrb[0].mxu0
      %439 = vmatprep.mubr.bf16.mxu0 0
      %440 = vmatmul.mubr.bf16.gmra.mrb[0].mxu0 %v331
      %v441 = vpop.f32.mrb[0].mxu0
      %v442 = vadd.f32 %v217, %v441
      %v443 = vpop.f32.mrb[0].mxu0
      %v444 = vpop.f32.mrb[0].mxu0
      %v445 = vadd.f32 %v217, %v444
      %v446 = vpop.f32.mrb[0].mxu0
      %447 = vmatprep.mubr.bf16.mxu0 0
      %448 = vmatmul.mubr.bf16.gmra.mrb[0].mxu0 %v334
      %v449 = vpop.f32.mrb[0].mxu0
      %v450 = vadd.f32 %v217, %v449
      %v451 = vpop.f32.mrb[0].mxu0
      %v452 = vpop.f32.mrb[0].mxu0
      %v453 = vadd.f32 %v217, %v452
      %v454 = vpop.f32.mrb[0].mxu0
      %455 = vmatprep.mubr.bf16.mxu0 0
      %456 = vmatmul.mubr.bf16.gmra.mrb[0].mxu0 %v337
      %v457 = vpop.f32.mrb[0].mxu0
      %v458 = vadd.f32 %v217, %v457
      %v459 = vpop.f32.mrb[0].mxu0
      %v460 = vpop.f32.mrb[0].mxu0
      %v461 = vadd.f32 %v217, %v460
      %v462 = vpop.f32.mrb[0].mxu0
      %463 = vmatprep.mubr.bf16.mxu0 0
      %464 = vmatmul.mubr.bf16.gmra.mrb[0].mxu0 %v340
      %v465 = vpop.f32.mrb[0].mxu0
      %v466 = vadd.f32 %v217, %v465
      %v467 = vpop.f32.mrb[0].mxu0
      %v468 = vpop.f32.mrb[0].mxu0
      %v469 = vadd.f32 %v217, %v468
      %v470 = vpop.f32.mrb[0].mxu0
      %471 = vmatprep.mubr.bf16.mxu0 0
      %472 = vmatmul.mubr.bf16.gmra.mrb[0].mxu0 %v343
      %v473 = vpop.f32.mrb[0].mxu0
      %v474 = vadd.f32 %v217, %v473
      %v475 = vpop.f32.mrb[0].mxu0
      %v476 = vpop.f32.mrb[0].mxu0
      %v477 = vadd.f32 %v217, %v476
      %v478 = vpop.f32.mrb[0].mxu0
      %479 = vmatprep.mubr.bf16.mxu0 0
      %480 = vmatmul.mubr.bf16.gmra.mrb[0].mxu0 %v346
      %v481 = vpop.f32.mrb[0].mxu0
      %v482 = vadd.f32 %v217, %v481
      %v483 = vpop.f32.mrb[0].mxu0
      %v484 = vpop.f32.mrb[0].mxu0
      %v485 = vadd.f32 %v217, %v484
      %v486 = vpop.f32.mrb[0].mxu0
      %487 = vmatprep.mubr.bf16.mxu0 0
      %488 = vmatmul.mubr.bf16.gmra.mrb[0].mxu0 %v349
      %v489 = vpop.f32.mrb[0].mxu0
      %v490 = vadd.f32 %v217, %v489
      %v491 = vpop.f32.mrb[0].mxu0
      %v492 = vpop.f32.mrb[0].mxu0
      %v493 = vadd.f32 %v217, %v492
      %v494 = vpop.f32.mrb[0].mxu0
      %495 = vmatprep.mubr.bf16.mxu0 0
      %496 = vmatmul.mubr.bf16.gmra.mrb[0].mxu0 %v352
      %v497 = vpop.f32.mrb[0].mxu0
      %v498 = vadd.f32 %v217, %v497
      %v499 = vpop.f32.mrb[0].mxu0
      %v500 = vpop.f32.mrb[0].mxu0
      %v501 = vadd.f32 %v217, %v500
      %v502 = vpop.f32.mrb[0].mxu0
      %503 = vmatprep.mubr.bf16.mxu0 0
      %504 = vmatmul.mubr.bf16.gmra.mrb[0].mxu0 %v355
      %v505 = vpop.f32.mrb[0].mxu0
      %v506 = vadd.f32 %v217, %v505
      %v507 = vpop.f32.mrb[0].mxu0
      %v508 = vpop.f32.mrb[0].mxu0
      %v509 = vadd.f32 %v217, %v508
      %v510 = vpop.f32.mrb[0].mxu0
      %511 = vmatprep.mubr.bf16.mxu0 0
      %512 = vmatmul.mubr.bf16.gmra.mrb[0].mxu0 %v358
      %v513 = vpop.f32.mrb[0].mxu0
      %v514 = vadd.f32 %v217, %v513
      %v515 = vpop.f32.mrb[0].mxu0
      %v516 = vpop.f32.mrb[0].mxu0
      %v517 = vadd.f32 %v217, %v516
      %v518 = vpop.f32.mrb[0].mxu0
      %519 = vmatprep.mubr.bf16.mxu0 0
      %520 = vmatmul.mubr.bf16.gmra.mrb[0].mxu0 %v361
      %v521 = vpop.f32.mrb[0].mxu0
      %v522 = vadd.f32 %v217, %v521
      %v523 = vpop.f32.mrb[0].mxu0
      %v524 = vpop.f32.mrb[0].mxu0
      %v525 = vadd.f32 %v217, %v524
      %v526 = vpop.f32.mrb[0].mxu0
      %527 = vdwg.mxu0
      %v528 = vpack.c.bf16 %v405, %v402
      %v529 = vpack.c.bf16 %v413, %v410
      %v530 = vpack.c.bf16 %v421, %v418
      %v531 = vpack.c.bf16 %v429, %v426
      %v532 = vpack.c.bf16 %v437, %v434
      %v533 = vpack.c.bf16 %v445, %v442
      %v534 = vpack.c.bf16 %v453, %v450
      %v535 = vpack.c.bf16 %v461, %v458
      %v536 = vpack.c.bf16 %v469, %v466
      %v537 = vpack.c.bf16 %v477, %v474
      %v538 = vpack.c.bf16 %v485, %v482
      %v539 = vpack.c.bf16 %v493, %v490
      %v540 = vpack.c.bf16 %v501, %v498
      %v541 = vpack.c.bf16 %v509, %v506
      %v542 = vpack.c.bf16 %v517, %v514
      %v543 = vpack.c.bf16 %v525, %v522
      %v560 = vunpack.c.l.b16 %v528
      %v561 = vunpack.c.h.b16 %v528
      %v562 = vunpack.c.l.b16 %v529
      %v563 = vunpack.c.h.b16 %v529
      %v564 = vunpack.c.l.b16 %v530
      %v565 = vunpack.c.h.b16 %v530
      %v566 = vunpack.c.l.b16 %v531
      %v567 = vunpack.c.h.b16 %v531
      %v568 = vunpack.c.l.b16 %v532
      %v569 = vunpack.c.h.b16 %v532
      %v570 = vunpack.c.l.b16 %v533
      %v571 = vunpack.c.h.b16 %v533
      %v572 = vunpack.c.l.b16 %v534
      %v573 = vunpack.c.h.b16 %v534
      %v574 = vunpack.c.l.b16 %v535
      %v575 = vunpack.c.h.b16 %v535
      %v576 = vunpack.c.l.b16 %v536
      %v577 = vunpack.c.h.b16 %v536
      %v578 = vunpack.c.l.b16 %v537
      %v579 = vunpack.c.h.b16 %v537
      %v580 = vunpack.c.l.b16 %v538
      %v581 = vunpack.c.h.b16 %v538
      %v582 = vunpack.c.l.b16 %v539
      %v583 = vunpack.c.h.b16 %v539
      %v584 = vunpack.c.l.b16 %v540
      %v585 = vunpack.c.h.b16 %v540
      %v586 = vunpack.c.l.b16 %v541
      %v587 = vunpack.c.h.b16 %v541
      %v588 = vunpack.c.l.b16 %v542
      %v589 = vunpack.c.h.b16 %v542
      %v590 = vunpack.c.l.b16 %v543
      %v591 = vunpack.c.h.b16 %v543
      %v592 = vpack.c.b16 %v560, %v560
      %v593 = vpack.c.b16 %v561, %v561
      %v594 = vpack.c.b16 %v562, %v562
      %v595 = vpack.c.b16 %v563, %v563
      %v596 = vpack.c.b16 %v564, %v564
      %v597 = vpack.c.b16 %v565, %v565
      %v598 = vpack.c.b16 %v566, %v566
      %v599 = vpack.c.b16 %v567, %v567
      %v600 = vpack.c.b16 %v568, %v568
      %v601 = vpack.c.b16 %v569, %v569
      %v602 = vpack.c.b16 %v570, %v570
      %v603 = vpack.c.b16 %v571, %v571
      %v604 = vpack.c.b16 %v572, %v572
      %v605 = vpack.c.b16 %v573, %v573
      %v606 = vpack.c.b16 %v574, %v574
      %v607 = vpack.c.b16 %v575, %v575
      %v608 = vpack.c.b16 %v576, %v576
      %v609 = vpack.c.b16 %v577, %v577
      %v610 = vpack.c.b16 %v578, %v578
      %v611 = vpack.c.b16 %v579, %v579
      %v612 = vpack.c.b16 %v580, %v580
      %v613 = vpack.c.b16 %v581, %v581
      %v614 = vpack.c.b16 %v582, %v582
      %v615 = vpack.c.b16 %v583, %v583
      %v616 = vpack.c.b16 %v584, %v584
      %v617 = vpack.c.b16 %v585, %v585
      %v618 = vpack.c.b16 %v586, %v586
      %v619 = vpack.c.b16 %v587, %v587
      %v620 = vpack.c.b16 %v588, %v588
      %v621 = vpack.c.b16 %v589, %v589
      %v622 = vpack.c.b16 %v590, %v590
      %v623 = vpack.c.b16 %v591, %v591
      %656 = vst [vmem:[%s172] sm:$0xf] %v592
      %657 = vst [vmem:[%s172 + $0x4] sm:$0xf] %v593
      %658 = vst [vmem:[%s172 + $0x8] sm:$0xf] %v594
      %659 = vst [vmem:[%s172 + $0xc] sm:$0xf] %v595
      %660 = vst [vmem:[%s172 + $0x10] sm:$0xf] %v596
      %661 = vst [vmem:[%s172 + $0x14] sm:$0xf] %v597
      %662 = vst [vmem:[%s172 + $0x18] sm:$0xf] %v598
      %663 = vst [vmem:[%s172 + $0x1c] sm:$0xf] %v599
      %664 = vst [vmem:[%s172 + $0x20] sm:$0xf] %v600
      %665 = vst [vmem:[%s172 + $0x24] sm:$0xf] %v601
      %666 = vst [vmem:[%s172 + $0x28] sm:$0xf] %v602
      %667 = vst [vmem:[%s172 + $0x2c] sm:$0xf] %v603
      %668 = vst [vmem:[%s172 + $0x30] sm:$0xf] %v604
      %669 = vst [vmem:[%s172 + $0x34] sm:$0xf] %v605
      %670 = vst [vmem:[%s172 + $0x38] sm:$0xf] %v606
      %671 = vst [vmem:[%s172 + $0x3c] sm:$0xf] %v607
      %672 = vst [vmem:[%s172 + $0x40] sm:$0xf] %v608
      %673 = vst [vmem:[%s172 + $0x44] sm:$0xf] %v609
      %674 = vst [vmem:[%s172 + $0x48] sm:$0xf] %v610
      %675 = vst [vmem:[%s172 + $0x4c] sm:$0xf] %v611
      %676 = vst [vmem:[%s172 + $0x50] sm:$0xf] %v612
      %677 = vst [vmem:[%s172 + $0x54] sm:$0xf] %v613
      %678 = vst [vmem:[%s172 + $0x58] sm:$0xf] %v614
      %679 = vst [vmem:[%s172 + $0x5c] sm:$0xf] %v615
      %680 = vst [vmem:[%s172 + $0x60] sm:$0xf] %v616
      %681 = vst [vmem:[%s172 + $0x64] sm:$0xf] %v617
      %682 = vst [vmem:[%s172 + $0x68] sm:$0xf] %v618
      %683 = vst [vmem:[%s172 + $0x6c] sm:$0xf] %v619
      %684 = vst [vmem:[%s172 + $0x70] sm:$0xf] %v620
      %685 = vst [vmem:[%s172 + $0x74] sm:$0xf] %v621
      %686 = vst [vmem:[%s172 + $0x78] sm:$0xf] %v622
      %687 = vst [vmem:[%s172 + $0x7c] sm:$0xf] %v623
      %s688 = smul.u32 32, %s14
      %p689 = scmp.lt.s32.totalorder %s688, 63
      %s690 = scalar_select %p689, %s688, 63
      %s691 = smul.addr %s690, 4
      %s692 = scalar_lea.vmem %s3, %s691
      // Predicated region
      $region33: #{dcn_layer_forward.1} parent=31 // pred_check
        %p693 = pneg %p100
      $region34: #{dcn_layer_forward.1} parent=31 // pred_check_branch
        %695 = sbr.rel (%p693) target = $region36
      $region35: #{dcn_layer_forward.1} parent=31 // pred_region
        %s696 = smul.u32 32, %s14
      $region36: #{dcn_layer_forward.1} parent=31 // pred_fallthru
        _
    $region32: #{dcn_layer_forward.1} parent=5 // pred_fallthru
      _
    %p697 = scmp.le.s32.totalorder 2, %s9
    // Predicated region
    $region37: #{dcn_layer_forward.1} parent=5 // pred_check
      %p698 = pneg %p697
    $region38: #{dcn_layer_forward.1} parent=5 // pred_check_branch
      %700 = sbr.rel (%p698) target = $region40
    $region39: #{dcn_layer_forward.1} parent=5 // pred_region
      %s701 = ssub.s32 %s9, 2
      // Predicated region
      $region41: #{dcn_layer_forward.1} parent=39 // pred_check
        %p702 = pneg %p106
      $region42: #{dcn_layer_forward.1} parent=39 // pred_check_branch
        %704 = sbr.rel (%p702) target = $region44
      $region43: #{dcn_layer_forward.1} parent=39 // pred_region
        %s705 = smul.u32 32, %s15
        %p706 = scmp.lt.s32.totalorder %s705, 63
        %s707 = scalar_select %p706, %s705, 63
        %s708 = smul.addr %s707, 4
        %s709 = scalar_lea.vmem %s3, %s708
      $region44: #{dcn_layer_forward.1} parent=39 // pred_fallthru
        _
    $region40: #{dcn_layer_forward.1} parent=5 // pred_fallthru
      _
  $region6: #{dcn_layer_forward.1} parent=0 // loop_footer
    %s13 = sadd.s32 1, %s9
  $region7: #{dcn_layer_forward.1} parent=0 // loop_footer_branch
    %8 = sbr.rel target = $region3
  $region8: #{dcn_layer_forward.1} parent=0 // loop_exit
    _

</llo_original>
